<compile_context>
chip_gen: v7x
topology: tpu7x:2x2x1
jax: 0.10.0
libtpu: 0.0.40
codegen_flags: <defaults>
</compile_context>

<pallas_src>
import math
import numpy as np
import jax
import jax.numpy as jnp
from jax.experimental import pallas as pl
from jax.experimental.pallas import tpu as pltpu


# ----------------------------------------------------------------------------
# Pallas kernel: complex channel contraction over lane-packed spectral regions.
#   x block: [2, B, Cin,  T]   (axis 0 = real/imag)
#   w block: [2, Cin, Cout, T]
#   o block: [2, B, Cout, T]
#   out[b,o,t] = sum_i x[b,i,t] * w[i,o,t]   (complex)
# ----------------------------------------------------------------------------
def _compl_mul_kernel(x_ref, w_ref, o_ref):
    xr = x_ref[0]                      # [B, Cin, T]
    xi = x_ref[1]
    wr = w_ref[0]                      # [Cin, Cout, T]
    wi = w_ref[1]

    _, B, Cin, T = x_ref.shape
    Cout = w_ref.shape[2]

    acc_r = jnp.zeros((B, Cout, T), jnp.float32)
    acc_i = jnp.zeros((B, Cout, T), jnp.float32)

    # Unrolled accumulation over input channels: keeps the reduction as a
    # running add over full-lane [B, Cout, T] vregs (no non-minor-axis reduce,
    # no Cin-expanded intermediate).
    for i in range(Cin):
        xr_i = xr[:, i, :][:, None, :]     # [B, 1, T]
        xi_i = xi[:, i, :][:, None, :]
        wr_i = wr[i][None, :, :]           # [1, Cout, T]
        wi_i = wi[i][None, :, :]

        # Gauss 3-multiply complex product (pre-adds are on the small
        # un-broadcast operands, multiplies on the [B, Cout, T] result).
        s_x = xr_i + xi_i                  # [B, 1, T]
        d_w = wi_i - wr_i                  # [1, Cout, T]
        s_w = wr_i + wi_i                  # [1, Cout, T]
        k1 = wr_i * s_x                    # [B, Cout, T]
        k2 = xr_i * d_w
        k3 = xi_i * s_w

        acc_r = acc_r + (k1 - k3)          # = sum_i xr*wr - xi*wi
        acc_i = acc_i + (k1 + k2)          # = sum_i xr*wi + xi*wr

    o_ref[0] = acc_r
    o_ref[1] = acc_i


def compl_mul_packed(x_pk, w_pk, lane_tile=None):
    """x_pk: [2,B,Cin,L], w_pk: [2,Cin,Cout,L] -> [2,B,Cout,L] (f32).

    L is the lane-packed region*pixel axis.  By default the whole problem is a
    single grid step (everything fits VMEM at these sizes); for scaled-up
    configs pass `lane_tile` = a divisor of L that is a multiple of 128.
    """
    _, B, Cin, L = x_pk.shape
    Cout = w_pk.shape[2]

    if lane_tile is None or lane_tile >= L:
        lane_tile = L
    assert L % lane_tile == 0
    assert lane_tile == L or lane_tile % 128 == 0
    n_tiles = L // lane_tile

    x_spec = pl.BlockSpec((2, B, Cin, lane_tile), lambda t: (0, 0, 0, t))
    w_spec = pl.BlockSpec((2, Cin, Cout, lane_tile), lambda t: (0, 0, 0, t))
    o_spec = pl.BlockSpec((2, B, Cout, lane_tile), lambda t: (0, 0, 0, t))

    return pl.pallas_call(
        _compl_mul_kernel,
        out_shape=jax.ShapeDtypeStruct((2, B, Cout, L), jnp.float32),
        grid_spec=pltpu.PrefetchScalarGridSpec(
            num_scalar_prefetch=0,
            grid=(n_tiles,),
            in_specs=[x_spec, w_spec],
            out_specs=o_spec,
        ),
        compiler_params=pltpu.CompilerParams(
            dimension_semantics=("parallel",)),
    )(x_pk, w_pk)


# ----------------------------------------------------------------------------
# Module (parameters initialized deterministically in-script)
# ----------------------------------------------------------------------------
def _crand_uniform(key, shape):
    kr, ki = jax.random.split(key)
    return (jax.random.uniform(kr, shape, jnp.float32)
            + 1j * jax.random.uniform(ki, shape, jnp.float32)).astype(jnp.complex64)


def _crandn(key, shape):
    kr, ki = jax.random.split(key)
    # complex standard normal (total variance 1, like torch.randn cfloat)
    return ((jax.random.normal(kr, shape, jnp.float32)
             + 1j * jax.random.normal(ki, shape, jnp.float32))
            / jnp.sqrt(2.0)).astype(jnp.complex64)


class SpectralConv2dFastLoRAMoE:
    def __init__(self, key, in_channels, out_channels, modes1, modes2,
                 rank=4, scaling=0.1, num_experts=15):
        self.in_channels = in_channels
        self.out_channels = out_channels
        self.modes1 = modes1
        self.modes2 = modes2
        self.rank = rank
        self.scaling = scaling
        self.num_experts = num_experts
        self.scale = 1.0 / (in_channels * out_channels)

        k = jax.random.split(key, 6)
        self.weights1 = self.scale * _crand_uniform(
            k[0], (in_channels, out_channels, modes1, modes2))
        self.weights2 = self.scale * _crand_uniform(
            k[1], (in_channels, out_channels, modes1, modes2))
        # experts (stacked over expert axis)
        self.lora_a1 = 0.02 * _crandn(k[2], (num_experts, rank, in_channels))
        self.lora_b1 = 0.02 * _crandn(k[3], (num_experts, out_channels, rank, modes1, modes2))
        self.lora_a2 = 0.02 * _crandn(k[4], (num_experts, rank, in_channels))
        self.lora_b2 = 0.02 * _crandn(k[5], (num_experts, out_channels, rank, modes1, modes2))

    def _lora_weights(self, lora_a, lora_b):
        # torch: sum_r B[o,r,x,y] * A[r,i] -> [o,i,x,y] -> permute -> [i,o,x,y], * scaling
        return jnp.einsum('eorxy,eri->eioxy', lora_b, lora_a) * self.scaling

    def _build_regions(self, H, bound):
        """Ordered list of (row_start, col_start, weight_index) matching the
        exact PyTorch write order (later writes overwrite earlier ones).
        Note: the second expert band is anchored at `bound` (= W//2+1) on the
        row axis, exactly as in the PyTorch reference."""
        m1, m2 = self.modes1, self.modes2
        regions = [(0, 0, 0),            # weights1
                   (H - m1, 0, 1)]       # weights2
        ers = int(math.sqrt(self.num_experts + 1))
        for i in range(self.num_experts):
            r = (i + 1) // ers
            c = (i + 1) % ers
            rs, re = m1 * r, m1 * (r + 1)
            cs = m2 * c
            # TODO(synk): general Python-slice clamping/wrapping (when 4*modes
            # exceeds H or W//2+1) is not replicated; these asserts guard the
            # exact-slice regime used here.
            assert 0 <= rs and re <= H and cs + m2 <= bound
            assert 0 <= bound - re and bound - rs <= H
            regions.append((rs, cs, 2 + i))                             # expert1[i]
            regions.append((bound - re, cs, 2 + self.num_experts + i))  # expert2[i]
        return regions

    def _all_weights(self):
        lw1 = self._lora_weights(self.lora_a1, self.lora_b1)   # [E,Cin,Cout,m1,m2]
        lw2 = self._lora_weights(self.lora_a2, self.lora_b2)
        return jnp.concatenate(
            [self.weights1[None], self.weights2[None], lw1, lw2], axis=0)

    def forward(self, x):
        B, Cin, H, W = x.shape
        m1, m2 = self.modes1, self.modes2
        Cout = self.out_channels
        bound = W // 2 + 1

        x_ft = jnp.fft.rfft2(x)                      # [B, Cin, H, bound] complex64
        regions = self._build_regions(H, bound)
        all_w = self._all_weights()                  # [2+2E, Cin, Cout, m1, m2]
        R = len(regions)
        L = R * m1 * m2

        # Gather the input slices and the weight of each region in write order,
        # packing regions onto the lane axis (lane-dense: L = 512 here).
        # TODO(synk): the gather and the overlapping last-write-wins scatter
        # below stay as XLA slice/dynamic-update-slice glue; fusing them into
        # the kernel would require sequential in-kernel region writes.
        xb = jnp.stack([x_ft[:, :, rs:rs + m1, cs:cs + m2]
                        for (rs, cs, _) in regions], axis=2)          # [B,Cin,R,m1,m2]
        wb = jnp.stack([all_w[wi] for (_, _, wi) in regions], axis=2)  # [Cin,Cout,R,m1,m2]

        xb = xb.reshape(B, Cin, L)
        wb = wb.reshape(Cin, Cout, L)

        # Pack real/imag into one array each (leading axis of 2).
        x_pk = jnp.stack([jnp.real(xb), jnp.imag(xb)]).astype(jnp.float32)   # [2,B,Cin,L]
        w_pk = jnp.stack([jnp.real(wb), jnp.imag(wb)]).astype(jnp.float32)   # [2,Cin,Cout,L]

        out_pk = compl_mul_packed(x_pk, w_pk)                                # [2,B,Cout,L]
        out_blocks = (out_pk[0] + 1j * out_pk[1]).astype(jnp.complex64).reshape(
            B, Cout, R, m1, m2)

        # Scatter back in the exact PyTorch write order (regions overlap;
        # last write wins).
        out_ft = jnp.zeros((B, Cout, H, bound), dtype=jnp.complex64)
        for k, (rs, cs, _) in enumerate(regions):
            out_ft = out_ft.at[:, :, rs:rs + m1, cs:cs + m2].set(out_blocks[:, :, k])

        return jnp.fft.irfft2(out_ft, s=(H, W))      # [B, Cout, H, W] float32

    # pure-JAX reference (complex einsum), same write order — used only to
    # validate the Pallas kernel.
    def forward_reference(self, x):
        B, Cin, H, W = x.shape
        m1, m2 = self.modes1, self.modes2
        Cout = self.out_channels
        bound = W // 2 + 1

        x_ft = jnp.fft.rfft2(x)
        regions = self._build_regions(H, bound)
        all_w = self._all_weights()

        out_ft = jnp.zeros((B, Cout, H, bound), dtype=jnp.complex64)
        for (rs, cs, wi) in regions:
            blk = jnp.einsum('bixy,ioxy->boxy',
                             x_ft[:, :, rs:rs + m1, cs:cs + m2], all_w[wi])
            out_ft = out_ft.at[:, :, rs:rs + m1, cs:cs + m2].set(blk)
        return jnp.fft.irfft2(out_ft, s=(H, W))


# ----------------------------------------------------------------------------
if __name__ == "__main__":
    key = jax.random.PRNGKey(0)
    k_params, k_x = jax.random.split(key)

    in_channels, out_channels = 4, 4
    modes1, modes2 = 4, 4
    B, H, W = 2, 32, 32   # H >= 4*modes1 and W//2+1 >= 4*modes2 keeps all slices exact

    module = SpectralConv2dFastLoRAMoE(
        k_params, in_channels, out_channels, modes1, modes2,
        rank=4, scaling=0.1, num_experts=15)

    x = jax.random.normal(k_x, (B, in_channels, H, W), dtype=jnp.float32)

    y = module.forward(x)
    y = jax.block_until_ready(y)

    y_ref = jax.block_until_ready(module.forward_reference(x))
    np.testing.assert_allclose(np.asarray(y), np.asarray(y_ref),
                               rtol=1e-4, atol=1e-4)
    print("KERNEL_OK")
</pallas_src>

<mosaic_0001>
module attributes {stable_mosaic.version = 11 : i64} {
  func.func @_compl_mul_kernel(%arg0: i32, %arg1: memref<2x2x4x512xf32, #tpu.memory_space<vmem>>, %arg2: memref<2x4x4x512xf32, #tpu.memory_space<vmem>>, %arg3: memref<2x2x4x512xf32, #tpu.memory_space<vmem>>) attributes {dimension_semantics = [#tpu.dimension_semantics<parallel>], iteration_bounds = array<i64: 1>, scalar_prefetch = 0 : i64, scratch_operands = 0 : i64, tpu.core_type = #tpu.core_type<tc>, window_params = [{transform_indices = @transform_0, window_bounds = array<i64: 2, 2, 4, 512>}, {transform_indices = @transform_1, window_bounds = array<i64: 2, 4, 4, 512>}, {transform_indices = @transform_2, window_bounds = array<i64: 2, 2, 4, 512>}]} {
    %c0 = arith.constant 0 : index
    %c0_0 = arith.constant 0 : index
    %c0_1 = arith.constant 0 : index
    %c0_2 = arith.constant 0 : index
    %0 = vector.load %arg1[%c0, %c0_0, %c0_1, %c0_2] : memref<2x2x4x512xf32, #tpu.memory_space<vmem>>, vector<1x2x4x512xf32>
    %1 = vector.shape_cast %0 : vector<1x2x4x512xf32> to vector<2x4x512xf32>
    %c1 = arith.constant 1 : index
    %c0_3 = arith.constant 0 : index
    %c0_4 = arith.constant 0 : index
    %c0_5 = arith.constant 0 : index
    %2 = vector.load %arg1[%c1, %c0_3, %c0_4, %c0_5] : memref<2x2x4x512xf32, #tpu.memory_space<vmem>>, vector<1x2x4x512xf32>
    %3 = vector.shape_cast %2 : vector<1x2x4x512xf32> to vector<2x4x512xf32>
    %c0_6 = arith.constant 0 : index
    %c0_7 = arith.constant 0 : index
    %c0_8 = arith.constant 0 : index
    %c0_9 = arith.constant 0 : index
    %4 = vector.load %arg2[%c0_6, %c0_7, %c0_8, %c0_9] : memref<2x4x4x512xf32, #tpu.memory_space<vmem>>, vector<1x4x4x512xf32>
    %5 = vector.shape_cast %4 : vector<1x4x4x512xf32> to vector<4x4x512xf32>
    %c1_10 = arith.constant 1 : index
    %c0_11 = arith.constant 0 : index
    %c0_12 = arith.constant 0 : index
    %c0_13 = arith.constant 0 : index
    %6 = vector.load %arg2[%c1_10, %c0_11, %c0_12, %c0_13] : memref<2x4x4x512xf32, #tpu.memory_space<vmem>>, vector<1x4x4x512xf32>
    %7 = vector.shape_cast %6 : vector<1x4x4x512xf32> to vector<4x4x512xf32>
    %cst = arith.constant 0.000000e+00 : f32
    %8 = vector.broadcast %cst : f32 to vector<2x4x512xf32>
    %cst_14 = arith.constant 0.000000e+00 : f32
    %9 = vector.broadcast %cst_14 : f32 to vector<2x4x512xf32>
    %10 = vector.extract_strided_slice %1 {offsets = [0, 0, 0], sizes = [2, 1, 512], strides = [1, 1, 1]} : vector<2x4x512xf32> to vector<2x1x512xf32>
    %11 = vector.shape_cast %10 : vector<2x1x512xf32> to vector<2x512xf32>
    %12 = vector.shape_cast %11 : vector<2x512xf32> to vector<2x1x512xf32>
    %13 = vector.extract_strided_slice %3 {offsets = [0, 0, 0], sizes = [2, 1, 512], strides = [1, 1, 1]} : vector<2x4x512xf32> to vector<2x1x512xf32>
    %14 = vector.shape_cast %13 : vector<2x1x512xf32> to vector<2x512xf32>
    %15 = vector.shape_cast %14 : vector<2x512xf32> to vector<2x1x512xf32>
    %16 = vector.extract_strided_slice %5 {offsets = [0, 0, 0], sizes = [1, 4, 512], strides = [1, 1, 1]} : vector<4x4x512xf32> to vector<1x4x512xf32>
    %17 = vector.shape_cast %16 : vector<1x4x512xf32> to vector<4x512xf32>
    %18 = vector.shape_cast %17 : vector<4x512xf32> to vector<1x4x512xf32>
    %19 = vector.extract_strided_slice %7 {offsets = [0, 0, 0], sizes = [1, 4, 512], strides = [1, 1, 1]} : vector<4x4x512xf32> to vector<1x4x512xf32>
    %20 = vector.shape_cast %19 : vector<1x4x512xf32> to vector<4x512xf32>
    %21 = vector.shape_cast %20 : vector<4x512xf32> to vector<1x4x512xf32>
    %22 = arith.addf %12, %15 : vector<2x1x512xf32>
    %23 = arith.subf %21, %18 : vector<1x4x512xf32>
    %24 = arith.addf %18, %21 : vector<1x4x512xf32>
    %25 = vector.broadcast %18 : vector<1x4x512xf32> to vector<2x4x512xf32>
    %26 = vector.broadcast %22 : vector<2x1x512xf32> to vector<2x4x512xf32>
    %27 = arith.mulf %25, %26 : vector<2x4x512xf32>
    %28 = vector.broadcast %12 : vector<2x1x512xf32> to vector<2x4x512xf32>
    %29 = vector.broadcast %23 : vector<1x4x512xf32> to vector<2x4x512xf32>
    %30 = arith.mulf %28, %29 : vector<2x4x512xf32>
    %31 = vector.broadcast %15 : vector<2x1x512xf32> to vector<2x4x512xf32>
    %32 = vector.broadcast %24 : vector<1x4x512xf32> to vector<2x4x512xf32>
    %33 = arith.mulf %31, %32 : vector<2x4x512xf32>
    %34 = arith.subf %27, %33 : vector<2x4x512xf32>
    %35 = arith.addf %8, %34 : vector<2x4x512xf32>
    %36 = arith.addf %27, %30 : vector<2x4x512xf32>
    %37 = arith.addf %9, %36 : vector<2x4x512xf32>
    %38 = vector.extract_strided_slice %1 {offsets = [0, 1, 0], sizes = [2, 1, 512], strides = [1, 1, 1]} : vector<2x4x512xf32> to vector<2x1x512xf32>
    %39 = vector.shape_cast %38 : vector<2x1x512xf32> to vector<2x512xf32>
    %40 = vector.shape_cast %39 : vector<2x512xf32> to vector<2x1x512xf32>
    %41 = vector.extract_strided_slice %3 {offsets = [0, 1, 0], sizes = [2, 1, 512], strides = [1, 1, 1]} : vector<2x4x512xf32> to vector<2x1x512xf32>
    %42 = vector.shape_cast %41 : vector<2x1x512xf32> to vector<2x512xf32>
    %43 = vector.shape_cast %42 : vector<2x512xf32> to vector<2x1x512xf32>
    %44 = vector.extract_strided_slice %5 {offsets = [1, 0, 0], sizes = [1, 4, 512], strides = [1, 1, 1]} : vector<4x4x512xf32> to vector<1x4x512xf32>
    %45 = vector.shape_cast %44 : vector<1x4x512xf32> to vector<4x512xf32>
    %46 = vector.shape_cast %45 : vector<4x512xf32> to vector<1x4x512xf32>
    %47 = vector.extract_strided_slice %7 {offsets = [1, 0, 0], sizes = [1, 4, 512], strides = [1, 1, 1]} : vector<4x4x512xf32> to vector<1x4x512xf32>
    %48 = vector.shape_cast %47 : vector<1x4x512xf32> to vector<4x512xf32>
    %49 = vector.shape_cast %48 : vector<4x512xf32> to vector<1x4x512xf32>
    %50 = arith.addf %40, %43 : vector<2x1x512xf32>
    %51 = arith.subf %49, %46 : vector<1x4x512xf32>
    %52 = arith.addf %46, %49 : vector<1x4x512xf32>
    %53 = vector.broadcast %46 : vector<1x4x512xf32> to vector<2x4x512xf32>
    %54 = vector.broadcast %50 : vector<2x1x512xf32> to vector<2x4x512xf32>
    %55 = arith.mulf %53, %54 : vector<2x4x512xf32>
    %56 = vector.broadcast %40 : vector<2x1x512xf32> to vector<2x4x512xf32>
    %57 = vector.broadcast %51 : vector<1x4x512xf32> to vector<2x4x512xf32>
    %58 = arith.mulf %56, %57 : vector<2x4x512xf32>
    %59 = vector.broadcast %43 : vector<2x1x512xf32> to vector<2x4x512xf32>
    %60 = vector.broadcast %52 : vector<1x4x512xf32> to vector<2x4x512xf32>
    %61 = arith.mulf %59, %60 : vector<2x4x512xf32>
    %62 = arith.subf %55, %61 : vector<2x4x512xf32>
    %63 = arith.addf %35, %62 : vector<2x4x512xf32>
    %64 = arith.addf %55, %58 : vector<2x4x512xf32>
    %65 = arith.addf %37, %64 : vector<2x4x512xf32>
    %66 = vector.extract_strided_slice %1 {offsets = [0, 2, 0], sizes = [2, 1, 512], strides = [1, 1, 1]} : vector<2x4x512xf32> to vector<2x1x512xf32>
    %67 = vector.shape_cast %66 : vector<2x1x512xf32> to vector<2x512xf32>
    %68 = vector.shape_cast %67 : vector<2x512xf32> to vector<2x1x512xf32>
    %69 = vector.extract_strided_slice %3 {offsets = [0, 2, 0], sizes = [2, 1, 512], strides = [1, 1, 1]} : vector<2x4x512xf32> to vector<2x1x512xf32>
    %70 = vector.shape_cast %69 : vector<2x1x512xf32> to vector<2x512xf32>
    %71 = vector.shape_cast %70 : vector<2x512xf32> to vector<2x1x512xf32>
    %72 = vector.extract_strided_slice %5 {offsets = [2, 0, 0], sizes = [1, 4, 512], strides = [1, 1, 1]} : vector<4x4x512xf32> to vector<1x4x512xf32>
    %73 = vector.shape_cast %72 : vector<1x4x512xf32> to vector<4x512xf32>
    %74 = vector.shape_cast %73 : vector<4x512xf32> to vector<1x4x512xf32>
    %75 = vector.extract_strided_slice %7 {offsets = [2, 0, 0], sizes = [1, 4, 512], strides = [1, 1, 1]} : vector<4x4x512xf32> to vector<1x4x512xf32>
    %76 = vector.shape_cast %75 : vector<1x4x512xf32> to vector<4x512xf32>
    %77 = vector.shape_cast %76 : vector<4x512xf32> to vector<1x4x512xf32>
    %78 = arith.addf %68, %71 : vector<2x1x512xf32>
    %79 = arith.subf %77, %74 : vector<1x4x512xf32>
    %80 = arith.addf %74, %77 : vector<1x4x512xf32>
    %81 = vector.broadcast %74 : vector<1x4x512xf32> to vector<2x4x512xf32>
    %82 = vector.broadcast %78 : vector<2x1x512xf32> to vector<2x4x512xf32>
    %83 = arith.mulf %81, %82 : vector<2x4x512xf32>
    %84 = vector.broadcast %68 : vector<2x1x512xf32> to vector<2x4x512xf32>
    %85 = vector.broadcast %79 : vector<1x4x512xf32> to vector<2x4x512xf32>
    %86 = arith.mulf %84, %85 : vector<2x4x512xf32>
    %87 = vector.broadcast %71 : vector<2x1x512xf32> to vector<2x4x512xf32>
    %88 = vector.broadcast %80 : vector<1x4x512xf32> to vector<2x4x512xf32>
    %89 = arith.mulf %87, %88 : vector<2x4x512xf32>
    %90 = arith.subf %83, %89 : vector<2x4x512xf32>
    %91 = arith.addf %63, %90 : vector<2x4x512xf32>
    %92 = arith.addf %83, %86 : vector<2x4x512xf32>
    %93 = arith.addf %65, %92 : vector<2x4x512xf32>
    %94 = vector.extract_strided_slice %1 {offsets = [0, 3, 0], sizes = [2, 1, 512], strides = [1, 1, 1]} : vector<2x4x512xf32> to vector<2x1x512xf32>
    %95 = vector.shape_cast %94 : vector<2x1x512xf32> to vector<2x512xf32>
    %96 = vector.shape_cast %95 : vector<2x512xf32> to vector<2x1x512xf32>
    %97 = vector.extract_strided_slice %3 {offsets = [0, 3, 0], sizes = [2, 1, 512], strides = [1, 1, 1]} : vector<2x4x512xf32> to vector<2x1x512xf32>
    %98 = vector.shape_cast %97 : vector<2x1x512xf32> to vector<2x512xf32>
    %99 = vector.shape_cast %98 : vector<2x512xf32> to vector<2x1x512xf32>
    %100 = vector.extract_strided_slice %5 {offsets = [3, 0, 0], sizes = [1, 4, 512], strides = [1, 1, 1]} : vector<4x4x512xf32> to vector<1x4x512xf32>
    %101 = vector.shape_cast %100 : vector<1x4x512xf32> to vector<4x512xf32>
    %102 = vector.shape_cast %101 : vector<4x512xf32> to vector<1x4x512xf32>
    %103 = vector.extract_strided_slice %7 {offsets = [3, 0, 0], sizes = [1, 4, 512], strides = [1, 1, 1]} : vector<4x4x512xf32> to vector<1x4x512xf32>
    %104 = vector.shape_cast %103 : vector<1x4x512xf32> to vector<4x512xf32>
    %105 = vector.shape_cast %104 : vector<4x512xf32> to vector<1x4x512xf32>
    %106 = arith.addf %96, %99 : vector<2x1x512xf32>
    %107 = arith.subf %105, %102 : vector<1x4x512xf32>
    %108 = arith.addf %102, %105 : vector<1x4x512xf32>
    %109 = vector.broadcast %102 : vector<1x4x512xf32> to vector<2x4x512xf32>
    %110 = vector.broadcast %106 : vector<2x1x512xf32> to vector<2x4x512xf32>
    %111 = arith.mulf %109, %110 : vector<2x4x512xf32>
    %112 = vector.broadcast %96 : vector<2x1x512xf32> to vector<2x4x512xf32>
    %113 = vector.broadcast %107 : vector<1x4x512xf32> to vector<2x4x512xf32>
    %114 = arith.mulf %112, %113 : vector<2x4x512xf32>
    %115 = vector.broadcast %99 : vector<2x1x512xf32> to vector<2x4x512xf32>
    %116 = vector.broadcast %108 : vector<1x4x512xf32> to vector<2x4x512xf32>
    %117 = arith.mulf %115, %116 : vector<2x4x512xf32>
    %118 = arith.subf %111, %117 : vector<2x4x512xf32>
    %119 = arith.addf %91, %118 : vector<2x4x512xf32>
    %120 = arith.addf %111, %114 : vector<2x4x512xf32>
    %121 = arith.addf %93, %120 : vector<2x4x512xf32>
    %c0_15 = arith.constant 0 : index
    %c0_16 = arith.constant 0 : index
    %c0_17 = arith.constant 0 : index
    %c0_18 = arith.constant 0 : index
    %122 = vector.load %arg3[%c0_15, %c0_16, %c0_17, %c0_18] : memref<2x2x4x512xf32, #tpu.memory_space<vmem>>, vector<1x2x4x512xf32>
    %123 = vector.shape_cast %122 : vector<1x2x4x512xf32> to vector<2x4x512xf32>
    %124 = vector.shape_cast %119 : vector<2x4x512xf32> to vector<1x2x4x512xf32>
    tpu.vector_store %arg3[%c0_15, %c0_16, %c0_17, %c0_18], %124 {strides = array<i32>} : memref<2x2x4x512xf32, #tpu.memory_space<vmem>>, vector<1x2x4x512xf32>,
    %c1_19 = arith.constant 1 : index
    %c0_20 = arith.constant 0 : index
    %c0_21 = arith.constant 0 : index
    %c0_22 = arith.constant 0 : index
    %125 = vector.load %arg3[%c1_19, %c0_20, %c0_21, %c0_22] : memref<2x2x4x512xf32, #tpu.memory_space<vmem>>, vector<1x2x4x512xf32>
    %126 = vector.shape_cast %125 : vector<1x2x4x512xf32> to vector<2x4x512xf32>
    %127 = vector.shape_cast %121 : vector<2x4x512xf32> to vector<1x2x4x512xf32>
    tpu.vector_store %arg3[%c1_19, %c0_20, %c0_21, %c0_22], %127 {strides = array<i32>} : memref<2x2x4x512xf32, #tpu.memory_space<vmem>>, vector<1x2x4x512xf32>,
    return
  }
  func.func @transform_0(%arg0: i32) -> (i32, i32, i32, i32) {
    %c0_i32 = arith.constant 0 : i32
    %c0_i32_0 = arith.constant 0 : i32
    %c0_i32_1 = arith.constant 0 : i32
    %c0_i32_2 = arith.constant 0 : i32
    return %c0_i32, %c0_i32_0, %c0_i32_1, %arg0 : i32, i32, i32, i32
  }
  func.func @transform_1(%arg0: i32) -> (i32, i32, i32, i32) {
    %c0_i32 = arith.constant 0 : i32
    %c0_i32_0 = arith.constant 0 : i32
    %c0_i32_1 = arith.constant 0 : i32
    %c0_i32_2 = arith.constant 0 : i32
    return %c0_i32, %c0_i32_0, %c0_i32_1, %arg0 : i32, i32, i32, i32
  }
  func.func @transform_2(%arg0: i32) -> (i32, i32, i32, i32) {
    %c0_i32 = arith.constant 0 : i32
    %c0_i32_0 = arith.constant 0 : i32
    %c0_i32_1 = arith.constant 0 : i32
    %c0_i32_2 = arith.constant 0 : i32
    return %c0_i32, %c0_i32_0, %c0_i32_1, %arg0 : i32, i32, i32, i32
  }
}

</mosaic_0001>

<llo_original>
// kernel: tpu_custom_call.1
$region0: #{tpu_custom_call.1}
  #allocation0 [shape = 'u32[]', space=smem, size = 0x4, offset = 0x4, fixed_abs, tag = 'smem constant byte address 0x4 - core index']
  #allocation1 [shape = 'u32[144,128]{1,0:T(1,128)}', space=vmem, size = 0x12000, scoped, tag = 'internal scratch']
  %s0 = inlined_call_operand.hbm [shape: f32[2,2,4,512], index: 0, kind: input, shape index: {}]
  %s1 = inlined_call_operand.hbm [shape: f32[2,4,4,512], index: 1, kind: input, shape index: {}]
  %s2 = inlined_call_operand.hbm [shape: f32[2,2,4,512], index: 2, kind: output, shape index: {}]
  %s3 = sld [smem:[#allocation0]]
  $region26: #{tpu_custom_call.1} parent=0
    _
  %s5 = ssub.s32 1, %s3
  %s6 = scalar_select 0, %s5, %s3
  $region1: #{tpu_custom_call.1} parent=0
    #allocation2 [shape = 'u8[32768]{0}', space=vmem, size = 0x8000, scoped, tag = 'input window, operand 0, single buffered']
    #allocation3 [shape = 's32[1]{0}', space=sflag, size = 0x4, scoped, tag = 'scoped memory for tpu_custom_call.1']
    #allocation4 [shape = 's32[1]{0}', space=sflag, size = 0x4, scoped, tag = 'scoped memory for tpu_custom_call.1']
    #allocation5 [shape = 'u8[65536]{0}', space=vmem, size = 0x10000, scoped, tag = 'input window, operand 1, single buffered']
    #allocation6 [shape = 's32[1]{0}', space=sflag, size = 0x4, scoped, tag = 'scoped memory for tpu_custom_call.1']
    #allocation7 [shape = 'u8[32768]{0}', space=vmem, size = 0x8000, scoped, tag = 'output window, operand 0, single buffered']
    %7 = vsyncpa [#allocation3], 0
    %8 = vsyncpa [#allocation6], 0
    %9 = vsyncpa [#allocation4], 0
    // Predicated region
    $region2: #{tpu_custom_call.1} parent=1 // pred_check
      _
    $region3: #{tpu_custom_call.1} parent=1 // pred_check_branch
      %11 = sbr.rel (0) target = $region5
    $region4: #{tpu_custom_call.1} parent=1 // pred_region
      %s13 = ssub.s32 1024, 1024
      %14 = vsyncadd [#allocation3], %s13
      %s15 = sshll.u32 [#allocation2], 4
      %s16 = int_to_ptr.vmem [resolvable:$true] %s15
      %21 = dma.hbm_to_vmem [thread:$0]  %s0, 1024, %s16, [#allocation3], 256, 256, 16
    $region5: #{tpu_custom_call.1} parent=1 // pred_fallthru
      _
    // Predicated region
    $region6: #{tpu_custom_call.1} parent=1 // pred_check
      _
    $region7: #{tpu_custom_call.1} parent=1 // pred_check_branch
      %23 = sbr.rel (0) target = $region9
    $region8: #{tpu_custom_call.1} parent=1 // pred_region
      %s25 = ssub.s32 2048, 2048
      %26 = vsyncadd [#allocation6], %s25
      %s27 = sshll.u32 [#allocation5], 4
      %s28 = int_to_ptr.vmem [resolvable:$true] %s27
      %33 = dma.hbm_to_vmem [thread:$0]  %s1, 2048, %s28, [#allocation6], 256, 256, 16
    $region9: #{tpu_custom_call.1} parent=1 // pred_fallthru
      _
    // Predicated region
    $region10: #{tpu_custom_call.1} parent=1 // pred_check
      _
    $region11: #{tpu_custom_call.1} parent=1 // pred_check_branch
      %35 = sbr.rel (0) target = $region13
    $region12: #{tpu_custom_call.1} parent=1 // pred_region
      %36 = dma.done [#allocation3], 1024
    $region13: #{tpu_custom_call.1} parent=1 // pred_fallthru
      _
    // Predicated region
    $region14: #{tpu_custom_call.1} parent=1 // pred_check
      _
    $region15: #{tpu_custom_call.1} parent=1 // pred_check_branch
      %38 = sbr.rel (0) target = $region17
    $region16: #{tpu_custom_call.1} parent=1 // pred_region
      %39 = dma.done [#allocation6], 2048
    $region17: #{tpu_custom_call.1} parent=1 // pred_fallthru
      _
    %v40 = vld [vmem:[#allocation2] sm:$0xff]
    %v41 = vld [vmem:[#allocation2 + $0x8] sm:$0xff]
    %v42 = vld [vmem:[#allocation2 + $0x10] sm:$0xff]
    %v43 = vld [vmem:[#allocation2 + $0x18] sm:$0xff]
    %s44 = scalar_lea.vmem [#allocation2], 32
    %v45 = vld [vmem:[%s44] sm:$0xff]
    %v46 = vld [vmem:[%s44 + $0x8] sm:$0xff]
    %v47 = vld [vmem:[%s44 + $0x10] sm:$0xff]
    %v48 = vld [vmem:[%s44 + $0x18] sm:$0xff]
    %v49 = vld [vmem:[#allocation5] sm:$0xff]
    %v50 = vld [vmem:[#allocation5 + $0x8] sm:$0xff]
    %v51 = vld [vmem:[#allocation5 + $0x10] sm:$0xff]
    %v52 = vld [vmem:[#allocation5 + $0x18] sm:$0xff]
    %v53 = vld [vmem:[#allocation5 + $0x20] sm:$0xff]
    %v54 = vld [vmem:[#allocation5 + $0x28] sm:$0xff]
    %v55 = vld [vmem:[#allocation5 + $0x30] sm:$0xff]
    %v56 = vld [vmem:[#allocation5 + $0x38] sm:$0xff]
    %s57 = scalar_lea.vmem [#allocation5], 64
    %v58 = vld [vmem:[%s57] sm:$0xff]
    %v59 = vld [vmem:[%s57 + $0x8] sm:$0xff]
    %v60 = vld [vmem:[%s57 + $0x10] sm:$0xff]
    %v61 = vld [vmem:[%s57 + $0x18] sm:$0xff]
    %v62 = vld [vmem:[%s57 + $0x20] sm:$0xff]
    %v63 = vld [vmem:[%s57 + $0x28] sm:$0xff]
    %v64 = vld [vmem:[%s57 + $0x30] sm:$0xff]
    %v65 = vld [vmem:[%s57 + $0x38] sm:$0xff]
    %v66 = vadd.f32 %v40, %v45
    %v67 = vadd.f32 %v41, %v46
    %v68 = vadd.f32 %v42, %v47
    %v69 = vadd.f32 %v43, %v48
    %v70 = vsub.f32 %v58, %v49
    %v71 = vsub.f32 %v59, %v50
    %v72 = vadd.f32 %v49, %v58
    %v73 = vadd.f32 %v50, %v59
    %v78 = vlaneseq
    %v79 = vshrl.u32 %v78, 7
    %v80 = vsub.s32 0, %v79
    %v81 = vrot.slane %v66, %v80
    %v82 = vlaneseq
    %v83 = vshrl.u32 %v82, 7
    %v84 = vsub.s32 4, %v83
    %v85 = vrot.slane %v66, %v84
    %v86 = vlaneseq
    %v87 = vshrl.u32 %v86, 7
    %v88 = vsub.s32 0, %v87
    %v89 = vrot.slane %v67, %v88
    %v90 = vlaneseq
    %v91 = vshrl.u32 %v90, 7
    %v92 = vsub.s32 4, %v91
    %v93 = vrot.slane %v67, %v92
    %v94 = vlaneseq
    %v95 = vshrl.u32 %v94, 7
    %v96 = vsub.s32 0, %v95
    %v97 = vrot.slane %v68, %v96
    %v98 = vlaneseq
    %v99 = vshrl.u32 %v98, 7
    %v100 = vsub.s32 4, %v99
    %v101 = vrot.slane %v68, %v100
    %v102 = vlaneseq
    %v103 = vshrl.u32 %v102, 7
    %v104 = vsub.s32 0, %v103
    %v105 = vrot.slane %v69, %v104
    %v106 = vlaneseq
    %v107 = vshrl.u32 %v106, 7
    %v108 = vsub.s32 4, %v107
    %v109 = vrot.slane %v69, %v108
    %v118 = vlaneseq
    %v119 = vshrl.u32 %v118, 7
    %v120 = vsub.s32 0, %v119
    %v121 = vrot.slane %v81, %v120
    %v122 = vlaneseq
    %v123 = vshrl.u32 %v122, 7
    %v124 = vsub.s32 0, %v123
    %v125 = vrot.slane %v85, %v124
    %v126 = vlaneseq
    %v127 = vshrl.u32 %v126, 7
    %v128 = vsub.s32 0, %v127
    %v129 = vrot.slane %v89, %v128
    %v130 = vlaneseq
    %v131 = vshrl.u32 %v130, 7
    %v132 = vsub.s32 0, %v131
    %v133 = vrot.slane %v93, %v132
    %v134 = vlaneseq
    %v135 = vshrl.u32 %v134, 7
    %v136 = vsub.s32 0, %v135
    %v137 = vrot.slane %v97, %v136
    %v138 = vlaneseq
    %v139 = vshrl.u32 %v138, 7
    %v140 = vsub.s32 0, %v139
    %v141 = vrot.slane %v101, %v140
    %v142 = vlaneseq
    %v143 = vshrl.u32 %v142, 7
    %v144 = vsub.s32 0, %v143
    %v145 = vrot.slane %v105, %v144
    %v146 = vlaneseq
    %v147 = vshrl.u32 %v146, 7
    %v148 = vsub.s32 0, %v147
    %v149 = vrot.slane %v109, %v148
    %v158 = vcombine.low %v121, %v125
    %v159 = vcombine.low %v129, %v133
    %v160 = vcombine.low %v137, %v141
    %v161 = vcombine.low %v145, %v149
    %v166 = vmul.f32 %v49, %v158
    %v167 = vmul.f32 %v50, %v159
    %v168 = vmul.f32 %v49, %v160
    %v169 = vmul.f32 %v50, %v161
    %v174 = vlaneseq
    %v175 = vshrl.u32 %v174, 7
    %v176 = vsub.s32 0, %v175
    %v177 = vrot.slane %v40, %v176
    %v178 = vlaneseq
    %v179 = vshrl.u32 %v178, 7
    %v180 = vsub.s32 4, %v179
    %v181 = vrot.slane %v40, %v180
    %v182 = vlaneseq
    %v183 = vshrl.u32 %v182, 7
    %v184 = vsub.s32 0, %v183
    %v185 = vrot.slane %v41, %v184
    %v186 = vlaneseq
    %v187 = vshrl.u32 %v186, 7
    %v188 = vsub.s32 4, %v187
    %v189 = vrot.slane %v41, %v188
    %v190 = vlaneseq
    %v191 = vshrl.u32 %v190, 7
    %v192 = vsub.s32 0, %v191
    %v193 = vrot.slane %v42, %v192
    %v194 = vlaneseq
    %v195 = vshrl.u32 %v194, 7
    %v196 = vsub.s32 4, %v195
    %v197 = vrot.slane %v42, %v196
    %v198 = vlaneseq
    %v199 = vshrl.u32 %v198, 7
    %v200 = vsub.s32 0, %v199
    %v201 = vrot.slane %v43, %v200
    %v202 = vlaneseq
    %v203 = vshrl.u32 %v202, 7
    %v204 = vsub.s32 4, %v203
    %v205 = vrot.slane %v43, %v204
    %v214 = vlaneseq
    %v215 = vshrl.u32 %v214, 7
    %v216 = vsub.s32 0, %v215
    %v217 = vrot.slane %v177, %v216
    %v218 = vlaneseq
    %v219 = vshrl.u32 %v218, 7
    %v220 = vsub.s32 0, %v219
    %v221 = vrot.slane %v181, %v220
    %v222 = vlaneseq
    %v223 = vshrl.u32 %v222, 7
    %v224 = vsub.s32 0, %v223
    %v225 = vrot.slane %v185, %v224
    %v226 = vlaneseq
    %v227 = vshrl.u32 %v226, 7
    %v228 = vsub.s32 0, %v227
    %v229 = vrot.slane %v189, %v228
    %v230 = vlaneseq
    %v231 = vshrl.u32 %v230, 7
    %v232 = vsub.s32 0, %v231
    %v233 = vrot.slane %v193, %v232
    %v234 = vlaneseq
    %v235 = vshrl.u32 %v234, 7
    %v236 = vsub.s32 0, %v235
    %v237 = vrot.slane %v197, %v236
    %v238 = vlaneseq
    %v239 = vshrl.u32 %v238, 7
    %v240 = vsub.s32 0, %v239
    %v241 = vrot.slane %v201, %v240
    %v242 = vlaneseq
    %v243 = vshrl.u32 %v242, 7
    %v244 = vsub.s32 0, %v243
    %v245 = vrot.slane %v205, %v244
    %v248 = vcombine.high %v70, %v70
    %v249 = vcombine.high %v71, %v71
    %v252 = vmul.f32 %v217, %v70
    %v253 = vmul.f32 %v221, %v248
    %v254 = vmul.f32 %v225, %v71
    %v255 = vmul.f32 %v229, %v249
    %v256 = vmul.f32 %v233, %v70
    %v257 = vmul.f32 %v237, %v248
    %v258 = vmul.f32 %v241, %v71
    %v259 = vmul.f32 %v245, %v249
    %v264 = vlaneseq
    %v265 = vshrl.u32 %v264, 7
    %v266 = vsub.s32 0, %v265
    %v267 = vrot.slane %v45, %v266
    %v268 = vlaneseq
    %v269 = vshrl.u32 %v268, 7
    %v270 = vsub.s32 4, %v269
    %v271 = vrot.slane %v45, %v270
    %v272 = vlaneseq
    %v273 = vshrl.u32 %v272, 7
    %v274 = vsub.s32 0, %v273
    %v275 = vrot.slane %v46, %v274
    %v276 = vlaneseq
    %v277 = vshrl.u32 %v276, 7
    %v278 = vsub.s32 4, %v277
    %v279 = vrot.slane %v46, %v278
    %v280 = vlaneseq
    %v281 = vshrl.u32 %v280, 7
    %v282 = vsub.s32 0, %v281
    %v283 = vrot.slane %v47, %v282
    %v284 = vlaneseq
    %v285 = vshrl.u32 %v284, 7
    %v286 = vsub.s32 4, %v285
    %v287 = vrot.slane %v47, %v286
    %v288 = vlaneseq
    %v289 = vshrl.u32 %v288, 7
    %v290 = vsub.s32 0, %v289
    %v291 = vrot.slane %v48, %v290
    %v292 = vlaneseq
    %v293 = vshrl.u32 %v292, 7
    %v294 = vsub.s32 4, %v293
    %v295 = vrot.slane %v48, %v294
    %v304 = vlaneseq
    %v305 = vshrl.u32 %v304, 7
    %v306 = vsub.s32 0, %v305
    %v307 = vrot.slane %v267, %v306
    %v308 = vlaneseq
    %v309 = vshrl.u32 %v308, 7
    %v310 = vsub.s32 0, %v309
    %v311 = vrot.slane %v271, %v310
    %v312 = vlaneseq
    %v313 = vshrl.u32 %v312, 7
    %v314 = vsub.s32 0, %v313
    %v315 = vrot.slane %v275, %v314
    %v316 = vlaneseq
    %v317 = vshrl.u32 %v316, 7
    %v318 = vsub.s32 0, %v317
    %v319 = vrot.slane %v279, %v318
    %v320 = vlaneseq
    %v321 = vshrl.u32 %v320, 7
    %v322 = vsub.s32 0, %v321
    %v323 = vrot.slane %v283, %v322
    %v324 = vlaneseq
    %v325 = vshrl.u32 %v324, 7
    %v326 = vsub.s32 0, %v325
    %v327 = vrot.slane %v287, %v326
    %v328 = vlaneseq
    %v329 = vshrl.u32 %v328, 7
    %v330 = vsub.s32 0, %v329
    %v331 = vrot.slane %v291, %v330
    %v332 = vlaneseq
    %v333 = vshrl.u32 %v332, 7
    %v334 = vsub.s32 0, %v333
    %v335 = vrot.slane %v295, %v334
    %v338 = vcombine.high %v72, %v72
    %v339 = vcombine.high %v73, %v73
    %v342 = vmul.f32 %v307, %v72
    %v343 = vmul.f32 %v311, %v338
    %v344 = vmul.f32 %v315, %v73
    %v345 = vmul.f32 %v319, %v339
    %v346 = vmul.f32 %v323, %v72
    %v347 = vmul.f32 %v327, %v338
    %v348 = vmul.f32 %v331, %v73
    %v349 = vmul.f32 %v335, %v339
    %v358 = vcombine.low %v342, %v343
    %v359 = vcombine.low %v344, %v345
    %v360 = vcombine.low %v346, %v347
    %v361 = vcombine.low %v348, %v349
    %v366 = vsub.f32 %v166, %v358
    %v367 = vsub.f32 %v167, %v359
    %v368 = vsub.f32 %v168, %v360
    %v369 = vsub.f32 %v169, %v361
    %v370 = vadd.f32 %v366, 0.0
    %v371 = vadd.f32 %v367, 0.0
    %v372 = vadd.f32 %v368, 0.0
    %v373 = vadd.f32 %v369, 0.0
    %v382 = vcombine.low %v252, %v253
    %v383 = vcombine.low %v254, %v255
    %v384 = vcombine.low %v256, %v257
    %v385 = vcombine.low %v258, %v259
    %v390 = vadd.f32 %v166, %v382
    %v391 = vadd.f32 %v167, %v383
    %v392 = vadd.f32 %v168, %v384
    %v393 = vadd.f32 %v169, %v385
    %v394 = vadd.f32 %v390, 0.0
    %v395 = vadd.f32 %v391, 0.0
    %v396 = vadd.f32 %v392, 0.0
    %v397 = vadd.f32 %v393, 0.0
    %v398 = vsub.f32 %v60, %v51
    %v399 = vsub.f32 %v61, %v52
    %v400 = vadd.f32 %v51, %v60
    %v401 = vadd.f32 %v52, %v61
    %v402 = vlaneseq
    %v403 = vshrl.u32 %v402, 7
    %v404 = vsub.s32 1, %v403
    %v405 = vrot.slane %v66, %v404
    %v406 = vlaneseq
    %v407 = vshrl.u32 %v406, 7
    %v408 = vsub.s32 5, %v407
    %v409 = vrot.slane %v66, %v408
    %v410 = vlaneseq
    %v411 = vshrl.u32 %v410, 7
    %v412 = vsub.s32 1, %v411
    %v413 = vrot.slane %v67, %v412
    %v414 = vlaneseq
    %v415 = vshrl.u32 %v414, 7
    %v416 = vsub.s32 5, %v415
    %v417 = vrot.slane %v67, %v416
    %v418 = vlaneseq
    %v419 = vshrl.u32 %v418, 7
    %v420 = vsub.s32 1, %v419
    %v421 = vrot.slane %v68, %v420
    %v422 = vlaneseq
    %v423 = vshrl.u32 %v422, 7
    %v424 = vsub.s32 5, %v423
    %v425 = vrot.slane %v68, %v424
    %v426 = vlaneseq
    %v427 = vshrl.u32 %v426, 7
    %v428 = vsub.s32 1, %v427
    %v429 = vrot.slane %v69, %v428
    %v430 = vlaneseq
    %v431 = vshrl.u32 %v430, 7
    %v432 = vsub.s32 5, %v431
    %v433 = vrot.slane %v69, %v432
    %v442 = vlaneseq
    %v443 = vshrl.u32 %v442, 7
    %v444 = vsub.s32 1, %v443
    %v445 = vrot.slane %v405, %v444
    %v446 = vlaneseq
    %v447 = vshrl.u32 %v446, 7
    %v448 = vsub.s32 1, %v447
    %v449 = vrot.slane %v409, %v448
    %v450 = vlaneseq
    %v451 = vshrl.u32 %v450, 7
    %v452 = vsub.s32 1, %v451
    %v453 = vrot.slane %v413, %v452
    %v454 = vlaneseq
    %v455 = vshrl.u32 %v454, 7
    %v456 = vsub.s32 1, %v455
    %v457 = vrot.slane %v417, %v456
    %v458 = vlaneseq
    %v459 = vshrl.u32 %v458, 7
    %v460 = vsub.s32 1, %v459
    %v461 = vrot.slane %v421, %v460
    %v462 = vlaneseq
    %v463 = vshrl.u32 %v462, 7
    %v464 = vsub.s32 1, %v463
    %v465 = vrot.slane %v425, %v464
    %v466 = vlaneseq
    %v467 = vshrl.u32 %v466, 7
    %v468 = vsub.s32 1, %v467
    %v469 = vrot.slane %v429, %v468
    %v470 = vlaneseq
    %v471 = vshrl.u32 %v470, 7
    %v472 = vsub.s32 1, %v471
    %v473 = vrot.slane %v433, %v472
    %v482 = vcombine.low %v445, %v449
    %v483 = vcombine.low %v453, %v457
    %v484 = vcombine.low %v461, %v465
    %v485 = vcombine.low %v469, %v473
    %v490 = vmul.f32 %v51, %v482
    %v491 = vmul.f32 %v52, %v483
    %v492 = vmul.f32 %v51, %v484
    %v493 = vmul.f32 %v52, %v485
    %v494 = vlaneseq
    %v495 = vshrl.u32 %v494, 7
    %v496 = vsub.s32 1, %v495
    %v497 = vrot.slane %v40, %v496
    %v498 = vlaneseq
    %v499 = vshrl.u32 %v498, 7
    %v500 = vsub.s32 5, %v499
    %v501 = vrot.slane %v40, %v500
    %v502 = vlaneseq
    %v503 = vshrl.u32 %v502, 7
    %v504 = vsub.s32 1, %v503
    %v505 = vrot.slane %v41, %v504
    %v506 = vlaneseq
    %v507 = vshrl.u32 %v506, 7
    %v508 = vsub.s32 5, %v507
    %v509 = vrot.slane %v41, %v508
    %v510 = vlaneseq
    %v511 = vshrl.u32 %v510, 7
    %v512 = vsub.s32 1, %v511
    %v513 = vrot.slane %v42, %v512
    %v514 = vlaneseq
    %v515 = vshrl.u32 %v514, 7
    %v516 = vsub.s32 5, %v515
    %v517 = vrot.slane %v42, %v516
    %v518 = vlaneseq
    %v519 = vshrl.u32 %v518, 7
    %v520 = vsub.s32 1, %v519
    %v521 = vrot.slane %v43, %v520
    %v522 = vlaneseq
    %v523 = vshrl.u32 %v522, 7
    %v524 = vsub.s32 5, %v523
    %v525 = vrot.slane %v43, %v524
    %v534 = vlaneseq
    %v535 = vshrl.u32 %v534, 7
    %v536 = vsub.s32 1, %v535
    %v537 = vrot.slane %v497, %v536
    %v538 = vlaneseq
    %v539 = vshrl.u32 %v538, 7
    %v540 = vsub.s32 1, %v539
    %v541 = vrot.slane %v501, %v540
    %v542 = vlaneseq
    %v543 = vshrl.u32 %v542, 7
    %v544 = vsub.s32 1, %v543
    %v545 = vrot.slane %v505, %v544
    %v546 = vlaneseq
    %v547 = vshrl.u32 %v546, 7
    %v548 = vsub.s32 1, %v547
    %v549 = vrot.slane %v509, %v548
    %v550 = vlaneseq
    %v551 = vshrl.u32 %v550, 7
    %v552 = vsub.s32 1, %v551
    %v553 = vrot.slane %v513, %v552
    %v554 = vlaneseq
    %v555 = vshrl.u32 %v554, 7
    %v556 = vsub.s32 1, %v555
    %v557 = vrot.slane %v517, %v556
    %v558 = vlaneseq
    %v559 = vshrl.u32 %v558, 7
    %v560 = vsub.s32 1, %v559
    %v561 = vrot.slane %v521, %v560
    %v562 = vlaneseq
    %v563 = vshrl.u32 %v562, 7
    %v564 = vsub.s32 1, %v563
    %v565 = vrot.slane %v525, %v564
    %v568 = vcombine.high %v398, %v398
    %v569 = vcombine.high %v399, %v399
    %v572 = vmul.f32 %v537, %v398
    %v573 = vmul.f32 %v541, %v568
    %v574 = vmul.f32 %v545, %v399
    %v575 = vmul.f32 %v549, %v569
    %v576 = vmul.f32 %v553, %v398
    %v577 = vmul.f32 %v557, %v568
    %v578 = vmul.f32 %v561, %v399
    %v579 = vmul.f32 %v565, %v569
    %v580 = vlaneseq
    %v581 = vshrl.u32 %v580, 7
    %v582 = vsub.s32 1, %v581
    %v583 = vrot.slane %v45, %v582
    %v584 = vlaneseq
    %v585 = vshrl.u32 %v584, 7
    %v586 = vsub.s32 5, %v585
    %v587 = vrot.slane %v45, %v586
    %v588 = vlaneseq
    %v589 = vshrl.u32 %v588, 7
    %v590 = vsub.s32 1, %v589
    %v591 = vrot.slane %v46, %v590
    %v592 = vlaneseq
    %v593 = vshrl.u32 %v592, 7
    %v594 = vsub.s32 5, %v593
    %v595 = vrot.slane %v46, %v594
    %v596 = vlaneseq
    %v597 = vshrl.u32 %v596, 7
    %v598 = vsub.s32 1, %v597
    %v599 = vrot.slane %v47, %v598
    %v600 = vlaneseq
    %v601 = vshrl.u32 %v600, 7
    %v602 = vsub.s32 5, %v601
    %v603 = vrot.slane %v47, %v602
    %v604 = vlaneseq
    %v605 = vshrl.u32 %v604, 7
    %v606 = vsub.s32 1, %v605
    %v607 = vrot.slane %v48, %v606
    %v608 = vlaneseq
    %v609 = vshrl.u32 %v608, 7
    %v610 = vsub.s32 5, %v609
    %v611 = vrot.slane %v48, %v610
    %v620 = vlaneseq
    %v621 = vshrl.u32 %v620, 7
    %v622 = vsub.s32 1, %v621
    %v623 = vrot.slane %v583, %v622
    %v624 = vlaneseq
    %v625 = vshrl.u32 %v624, 7
    %v626 = vsub.s32 1, %v625
    %v627 = vrot.slane %v587, %v626
    %v628 = vlaneseq
    %v629 = vshrl.u32 %v628, 7
    %v630 = vsub.s32 1, %v629
    %v631 = vrot.slane %v591, %v630
    %v632 = vlaneseq
    %v633 = vshrl.u32 %v632, 7
    %v634 = vsub.s32 1, %v633
    %v635 = vrot.slane %v595, %v634
    %v636 = vlaneseq
    %v637 = vshrl.u32 %v636, 7
    %v638 = vsub.s32 1, %v637
    %v639 = vrot.slane %v599, %v638
    %v640 = vlaneseq
    %v641 = vshrl.u32 %v640, 7
    %v642 = vsub.s32 1, %v641
    %v643 = vrot.slane %v603, %v642
    %v644 = vlaneseq
    %v645 = vshrl.u32 %v644, 7
    %v646 = vsub.s32 1, %v645
    %v647 = vrot.slane %v607, %v646
    %v648 = vlaneseq
    %v649 = vshrl.u32 %v648, 7
    %v650 = vsub.s32 1, %v649
    %v651 = vrot.slane %v611, %v650
    %v654 = vcombine.high %v400, %v400
    %v655 = vcombine.high %v401, %v401
    %v658 = vmul.f32 %v623, %v400
    %v659 = vmul.f32 %v627, %v654
    %v660 = vmul.f32 %v631, %v401
    %v661 = vmul.f32 %v635, %v655
    %v662 = vmul.f32 %v639, %v400
    %v663 = vmul.f32 %v643, %v654
    %v664 = vmul.f32 %v647, %v401
    %v665 = vmul.f32 %v651, %v655
    %v674 = vcombine.low %v658, %v659
    %v675 = vcombine.low %v660, %v661
    %v676 = vcombine.low %v662, %v663
    %v677 = vcombine.low %v664, %v665
    %v682 = vsub.f32 %v490, %v674
    %v683 = vsub.f32 %v491, %v675
    %v684 = vsub.f32 %v492, %v676
    %v685 = vsub.f32 %v493, %v677
    %v686 = vadd.f32 %v370, %v682
    %v687 = vadd.f32 %v371, %v683
    %v688 = vadd.f32 %v372, %v684
    %v689 = vadd.f32 %v373, %v685
    %v698 = vcombine.low %v572, %v573
    %v699 = vcombine.low %v574, %v575
    %v700 = vcombine.low %v576, %v577
    %v701 = vcombine.low %v578, %v579
    %v706 = vadd.f32 %v490, %v698
    %v707 = vadd.f32 %v491, %v699
    %v708 = vadd.f32 %v492, %v700
    %v709 = vadd.f32 %v493, %v701
    %v710 = vadd.f32 %v394, %v706
    %v711 = vadd.f32 %v395, %v707
    %v712 = vadd.f32 %v396, %v708
    %v713 = vadd.f32 %v397, %v709
    %v714 = vsub.f32 %v62, %v53
    %v715 = vsub.f32 %v63, %v54
    %v716 = vadd.f32 %v53, %v62
    %v717 = vadd.f32 %v54, %v63
    %v718 = vlaneseq
    %v719 = vshrl.u32 %v718, 7
    %v720 = vsub.s32 2, %v719
    %v721 = vrot.slane %v66, %v720
    %v722 = vlaneseq
    %v723 = vshrl.u32 %v722, 7
    %v724 = vsub.s32 6, %v723
    %v725 = vrot.slane %v66, %v724
    %v726 = vlaneseq
    %v727 = vshrl.u32 %v726, 7
    %v728 = vsub.s32 2, %v727
    %v729 = vrot.slane %v67, %v728
    %v730 = vlaneseq
    %v731 = vshrl.u32 %v730, 7
    %v732 = vsub.s32 6, %v731
    %v733 = vrot.slane %v67, %v732
    %v734 = vlaneseq
    %v735 = vshrl.u32 %v734, 7
    %v736 = vsub.s32 2, %v735
    %v737 = vrot.slane %v68, %v736
    %v738 = vlaneseq
    %v739 = vshrl.u32 %v738, 7
    %v740 = vsub.s32 6, %v739
    %v741 = vrot.slane %v68, %v740
    %v742 = vlaneseq
    %v743 = vshrl.u32 %v742, 7
    %v744 = vsub.s32 2, %v743
    %v745 = vrot.slane %v69, %v744
    %v746 = vlaneseq
    %v747 = vshrl.u32 %v746, 7
    %v748 = vsub.s32 6, %v747
    %v749 = vrot.slane %v69, %v748
    %v758 = vlaneseq
    %v759 = vshrl.u32 %v758, 7
    %v760 = vsub.s32 2, %v759
    %v761 = vrot.slane %v721, %v760
    %v762 = vlaneseq
    %v763 = vshrl.u32 %v762, 7
    %v764 = vsub.s32 2, %v763
    %v765 = vrot.slane %v725, %v764
    %v766 = vlaneseq
    %v767 = vshrl.u32 %v766, 7
    %v768 = vsub.s32 2, %v767
    %v769 = vrot.slane %v729, %v768
    %v770 = vlaneseq
    %v771 = vshrl.u32 %v770, 7
    %v772 = vsub.s32 2, %v771
    %v773 = vrot.slane %v733, %v772
    %v774 = vlaneseq
    %v775 = vshrl.u32 %v774, 7
    %v776 = vsub.s32 2, %v775
    %v777 = vrot.slane %v737, %v776
    %v778 = vlaneseq
    %v779 = vshrl.u32 %v778, 7
    %v780 = vsub.s32 2, %v779
    %v781 = vrot.slane %v741, %v780
    %v782 = vlaneseq
    %v783 = vshrl.u32 %v782, 7
    %v784 = vsub.s32 2, %v783
    %v785 = vrot.slane %v745, %v784
    %v786 = vlaneseq
    %v787 = vshrl.u32 %v786, 7
    %v788 = vsub.s32 2, %v787
    %v789 = vrot.slane %v749, %v788
    %v798 = vcombine.low %v761, %v765
    %v799 = vcombine.low %v769, %v773
    %v800 = vcombine.low %v777, %v781
    %v801 = vcombine.low %v785, %v789
    %v806 = vmul.f32 %v53, %v798
    %v807 = vmul.f32 %v54, %v799
    %v808 = vmul.f32 %v53, %v800
    %v809 = vmul.f32 %v54, %v801
    %v810 = vlaneseq
    %v811 = vshrl.u32 %v810, 7
    %v812 = vsub.s32 2, %v811
    %v813 = vrot.slane %v40, %v812
    %v814 = vlaneseq
    %v815 = vshrl.u32 %v814, 7
    %v816 = vsub.s32 6, %v815
    %v817 = vrot.slane %v40, %v816
    %v818 = vlaneseq
    %v819 = vshrl.u32 %v818, 7
    %v820 = vsub.s32 2, %v819
    %v821 = vrot.slane %v41, %v820
    %v822 = vlaneseq
    %v823 = vshrl.u32 %v822, 7
    %v824 = vsub.s32 6, %v823
    %v825 = vrot.slane %v41, %v824
    %v826 = vlaneseq
    %v827 = vshrl.u32 %v826, 7
    %v828 = vsub.s32 2, %v827
    %v829 = vrot.slane %v42, %v828
    %v830 = vlaneseq
    %v831 = vshrl.u32 %v830, 7
    %v832 = vsub.s32 6, %v831
    %v833 = vrot.slane %v42, %v832
    %v834 = vlaneseq
    %v835 = vshrl.u32 %v834, 7
    %v836 = vsub.s32 2, %v835
    %v837 = vrot.slane %v43, %v836
    %v838 = vlaneseq
    %v839 = vshrl.u32 %v838, 7
    %v840 = vsub.s32 6, %v839
    %v841 = vrot.slane %v43, %v840
    %v850 = vlaneseq
    %v851 = vshrl.u32 %v850, 7
    %v852 = vsub.s32 2, %v851
    %v853 = vrot.slane %v813, %v852
    %v854 = vlaneseq
    %v855 = vshrl.u32 %v854, 7
    %v856 = vsub.s32 2, %v855
    %v857 = vrot.slane %v817, %v856
    %v858 = vlaneseq
    %v859 = vshrl.u32 %v858, 7
    %v860 = vsub.s32 2, %v859
    %v861 = vrot.slane %v821, %v860
    %v862 = vlaneseq
    %v863 = vshrl.u32 %v862, 7
    %v864 = vsub.s32 2, %v863
    %v865 = vrot.slane %v825, %v864
    %v866 = vlaneseq
    %v867 = vshrl.u32 %v866, 7
    %v868 = vsub.s32 2, %v867
    %v869 = vrot.slane %v829, %v868
    %v870 = vlaneseq
    %v871 = vshrl.u32 %v870, 7
    %v872 = vsub.s32 2, %v871
    %v873 = vrot.slane %v833, %v872
    %v874 = vlaneseq
    %v875 = vshrl.u32 %v874, 7
    %v876 = vsub.s32 2, %v875
    %v877 = vrot.slane %v837, %v876
    %v878 = vlaneseq
    %v879 = vshrl.u32 %v878, 7
    %v880 = vsub.s32 2, %v879
    %v881 = vrot.slane %v841, %v880
    %v884 = vcombine.high %v714, %v714
    %v885 = vcombine.high %v715, %v715
    %v888 = vmul.f32 %v853, %v714
    %v889 = vmul.f32 %v857, %v884
    %v890 = vmul.f32 %v861, %v715
    %v891 = vmul.f32 %v865, %v885
    %v892 = vmul.f32 %v869, %v714
    %v893 = vmul.f32 %v873, %v884
    %v894 = vmul.f32 %v877, %v715
    %v895 = vmul.f32 %v881, %v885
    %v896 = vlaneseq
    %v897 = vshrl.u32 %v896, 7
    %v898 = vsub.s32 2, %v897
    %v899 = vrot.slane %v45, %v898
    %v900 = vlaneseq
    %v901 = vshrl.u32 %v900, 7
    %v902 = vsub.s32 6, %v901
    %v903 = vrot.slane %v45, %v902
    %v904 = vlaneseq
    %v905 = vshrl.u32 %v904, 7
    %v906 = vsub.s32 2, %v905
    %v907 = vrot.slane %v46, %v906
    %v908 = vlaneseq
    %v909 = vshrl.u32 %v908, 7
    %v910 = vsub.s32 6, %v909
    %v911 = vrot.slane %v46, %v910
    %v912 = vlaneseq
    %v913 = vshrl.u32 %v912, 7
    %v914 = vsub.s32 2, %v913
    %v915 = vrot.slane %v47, %v914
    %v916 = vlaneseq
    %v917 = vshrl.u32 %v916, 7
    %v918 = vsub.s32 6, %v917
    %v919 = vrot.slane %v47, %v918
    %v920 = vlaneseq
    %v921 = vshrl.u32 %v920, 7
    %v922 = vsub.s32 2, %v921
    %v923 = vrot.slane %v48, %v922
    %v924 = vlaneseq
    %v925 = vshrl.u32 %v924, 7
    %v926 = vsub.s32 6, %v925
    %v927 = vrot.slane %v48, %v926
    %v936 = vlaneseq
    %v937 = vshrl.u32 %v936, 7
    %v938 = vsub.s32 2, %v937
    %v939 = vrot.slane %v899, %v938
    %v940 = vlaneseq
    %v941 = vshrl.u32 %v940, 7
    %v942 = vsub.s32 2, %v941
    %v943 = vrot.slane %v903, %v942
    %v944 = vlaneseq
    %v945 = vshrl.u32 %v944, 7
    %v946 = vsub.s32 2, %v945
    %v947 = vrot.slane %v907, %v946
    %v948 = vlaneseq
    %v949 = vshrl.u32 %v948, 7
    %v950 = vsub.s32 2, %v949
    %v951 = vrot.slane %v911, %v950
    %v952 = vlaneseq
    %v953 = vshrl.u32 %v952, 7
    %v954 = vsub.s32 2, %v953
    %v955 = vrot.slane %v915, %v954
    %v956 = vlaneseq
    %v957 = vshrl.u32 %v956, 7
    %v958 = vsub.s32 2, %v957
    %v959 = vrot.slane %v919, %v958
    %v960 = vlaneseq
    %v961 = vshrl.u32 %v960, 7
    %v962 = vsub.s32 2, %v961
    %v963 = vrot.slane %v923, %v962
    %v964 = vlaneseq
    %v965 = vshrl.u32 %v964, 7
    %v966 = vsub.s32 2, %v965
    %v967 = vrot.slane %v927, %v966
    %v970 = vcombine.high %v716, %v716
    %v971 = vcombine.high %v717, %v717
    %v974 = vmul.f32 %v939, %v716
    %v975 = vmul.f32 %v943, %v970
    %v976 = vmul.f32 %v947, %v717
    %v977 = vmul.f32 %v951, %v971
    %v978 = vmul.f32 %v955, %v716
    %v979 = vmul.f32 %v959, %v970
    %v980 = vmul.f32 %v963, %v717
    %v981 = vmul.f32 %v967, %v971
    %v990 = vcombine.low %v974, %v975
    %v991 = vcombine.low %v976, %v977
    %v992 = vcombine.low %v978, %v979
    %v993 = vcombine.low %v980, %v981
    %v998 = vsub.f32 %v806, %v990
    %v999 = vsub.f32 %v807, %v991
    %v1000 = vsub.f32 %v808, %v992
    %v1001 = vsub.f32 %v809, %v993
    %v1002 = vadd.f32 %v686, %v998
    %v1003 = vadd.f32 %v687, %v999
    %v1004 = vadd.f32 %v688, %v1000
    %v1005 = vadd.f32 %v689, %v1001
    %v1014 = vcombine.low %v888, %v889
    %v1015 = vcombine.low %v890, %v891
    %v1016 = vcombine.low %v892, %v893
    %v1017 = vcombine.low %v894, %v895
    %v1022 = vadd.f32 %v806, %v1014
    %v1023 = vadd.f32 %v807, %v1015
    %v1024 = vadd.f32 %v808, %v1016
    %v1025 = vadd.f32 %v809, %v1017
    %v1026 = vadd.f32 %v710, %v1022
    %v1027 = vadd.f32 %v711, %v1023
    %v1028 = vadd.f32 %v712, %v1024
    %v1029 = vadd.f32 %v713, %v1025
    %v1030 = vsub.f32 %v64, %v55
    %v1031 = vsub.f32 %v65, %v56
    %v1032 = vadd.f32 %v55, %v64
    %v1033 = vadd.f32 %v56, %v65
    %v1034 = vlaneseq
    %v1035 = vshrl.u32 %v1034, 7
    %v1036 = vsub.s32 3, %v1035
    %v1037 = vrot.slane %v66, %v1036
    %v1038 = vlaneseq
    %v1039 = vshrl.u32 %v1038, 7
    %v1040 = vsub.s32 7, %v1039
    %v1041 = vrot.slane %v66, %v1040
    %v1042 = vlaneseq
    %v1043 = vshrl.u32 %v1042, 7
    %v1044 = vsub.s32 3, %v1043
    %v1045 = vrot.slane %v67, %v1044
    %v1046 = vlaneseq
    %v1047 = vshrl.u32 %v1046, 7
    %v1048 = vsub.s32 7, %v1047
    %v1049 = vrot.slane %v67, %v1048
    %v1050 = vlaneseq
    %v1051 = vshrl.u32 %v1050, 7
    %v1052 = vsub.s32 3, %v1051
    %v1053 = vrot.slane %v68, %v1052
    %v1054 = vlaneseq
    %v1055 = vshrl.u32 %v1054, 7
    %v1056 = vsub.s32 7, %v1055
    %v1057 = vrot.slane %v68, %v1056
    %v1058 = vlaneseq
    %v1059 = vshrl.u32 %v1058, 7
    %v1060 = vsub.s32 3, %v1059
    %v1061 = vrot.slane %v69, %v1060
    %v1062 = vlaneseq
    %v1063 = vshrl.u32 %v1062, 7
    %v1064 = vsub.s32 7, %v1063
    %v1065 = vrot.slane %v69, %v1064
    %v1074 = vlaneseq
    %v1075 = vshrl.u32 %v1074, 7
    %v1076 = vsub.s32 3, %v1075
    %v1077 = vrot.slane %v1037, %v1076
    %v1078 = vlaneseq
    %v1079 = vshrl.u32 %v1078, 7
    %v1080 = vsub.s32 3, %v1079
    %v1081 = vrot.slane %v1041, %v1080
    %v1082 = vlaneseq
    %v1083 = vshrl.u32 %v1082, 7
    %v1084 = vsub.s32 3, %v1083
    %v1085 = vrot.slane %v1045, %v1084
    %v1086 = vlaneseq
    %v1087 = vshrl.u32 %v1086, 7
    %v1088 = vsub.s32 3, %v1087
    %v1089 = vrot.slane %v1049, %v1088
    %v1090 = vlaneseq
    %v1091 = vshrl.u32 %v1090, 7
    %v1092 = vsub.s32 3, %v1091
    %v1093 = vrot.slane %v1053, %v1092
    %v1094 = vlaneseq
    %v1095 = vshrl.u32 %v1094, 7
    %v1096 = vsub.s32 3, %v1095
    %v1097 = vrot.slane %v1057, %v1096
    %v1098 = vlaneseq
    %v1099 = vshrl.u32 %v1098, 7
    %v1100 = vsub.s32 3, %v1099
    %v1101 = vrot.slane %v1061, %v1100
    %v1102 = vlaneseq
    %v1103 = vshrl.u32 %v1102, 7
    %v1104 = vsub.s32 3, %v1103
    %v1105 = vrot.slane %v1065, %v1104
    %v1114 = vcombine.low %v1077, %v1081
    %v1115 = vcombine.low %v1085, %v1089
    %v1116 = vcombine.low %v1093, %v1097
    %v1117 = vcombine.low %v1101, %v1105
    %v1122 = vmul.f32 %v55, %v1114
    %v1123 = vmul.f32 %v56, %v1115
    %v1124 = vmul.f32 %v55, %v1116
    %v1125 = vmul.f32 %v56, %v1117
    %v1126 = vlaneseq
    %v1127 = vshrl.u32 %v1126, 7
    %v1128 = vsub.s32 3, %v1127
    %v1129 = vrot.slane %v40, %v1128
    %v1130 = vlaneseq
    %v1131 = vshrl.u32 %v1130, 7
    %v1132 = vsub.s32 7, %v1131
    %v1133 = vrot.slane %v40, %v1132
    %v1134 = vlaneseq
    %v1135 = vshrl.u32 %v1134, 7
    %v1136 = vsub.s32 3, %v1135
    %v1137 = vrot.slane %v41, %v1136
    %v1138 = vlaneseq
    %v1139 = vshrl.u32 %v1138, 7
    %v1140 = vsub.s32 7, %v1139
    %v1141 = vrot.slane %v41, %v1140
    %v1142 = vlaneseq
    %v1143 = vshrl.u32 %v1142, 7
    %v1144 = vsub.s32 3, %v1143
    %v1145 = vrot.slane %v42, %v1144
    %v1146 = vlaneseq
    %v1147 = vshrl.u32 %v1146, 7
    %v1148 = vsub.s32 7, %v1147
    %v1149 = vrot.slane %v42, %v1148
    %v1150 = vlaneseq
    %v1151 = vshrl.u32 %v1150, 7
    %v1152 = vsub.s32 3, %v1151
    %v1153 = vrot.slane %v43, %v1152
    %v1154 = vlaneseq
    %v1155 = vshrl.u32 %v1154, 7
    %v1156 = vsub.s32 7, %v1155
    %v1157 = vrot.slane %v43, %v1156
    %v1166 = vlaneseq
    %v1167 = vshrl.u32 %v1166, 7
    %v1168 = vsub.s32 3, %v1167
    %v1169 = vrot.slane %v1129, %v1168
    %v1170 = vlaneseq
    %v1171 = vshrl.u32 %v1170, 7
    %v1172 = vsub.s32 3, %v1171
    %v1173 = vrot.slane %v1133, %v1172
    %v1174 = vlaneseq
    %v1175 = vshrl.u32 %v1174, 7
    %v1176 = vsub.s32 3, %v1175
    %v1177 = vrot.slane %v1137, %v1176
    %v1178 = vlaneseq
    %v1179 = vshrl.u32 %v1178, 7
    %v1180 = vsub.s32 3, %v1179
    %v1181 = vrot.slane %v1141, %v1180
    %v1182 = vlaneseq
    %v1183 = vshrl.u32 %v1182, 7
    %v1184 = vsub.s32 3, %v1183
    %v1185 = vrot.slane %v1145, %v1184
    %v1186 = vlaneseq
    %v1187 = vshrl.u32 %v1186, 7
    %v1188 = vsub.s32 3, %v1187
    %v1189 = vrot.slane %v1149, %v1188
    %v1190 = vlaneseq
    %v1191 = vshrl.u32 %v1190, 7
    %v1192 = vsub.s32 3, %v1191
    %v1193 = vrot.slane %v1153, %v1192
    %v1194 = vlaneseq
    %v1195 = vshrl.u32 %v1194, 7
    %v1196 = vsub.s32 3, %v1195
    %v1197 = vrot.slane %v1157, %v1196
    %v1200 = vcombine.high %v1030, %v1030
    %v1201 = vcombine.high %v1031, %v1031
    %v1204 = vmul.f32 %v1169, %v1030
    %v1205 = vmul.f32 %v1173, %v1200
    %v1206 = vmul.f32 %v1177, %v1031
    %v1207 = vmul.f32 %v1181, %v1201
    %v1208 = vmul.f32 %v1185, %v1030
    %v1209 = vmul.f32 %v1189, %v1200
    %v1210 = vmul.f32 %v1193, %v1031
    %v1211 = vmul.f32 %v1197, %v1201
    %v1212 = vlaneseq
    %v1213 = vshrl.u32 %v1212, 7
    %v1214 = vsub.s32 3, %v1213
    %v1215 = vrot.slane %v45, %v1214
    %v1216 = vlaneseq
    %v1217 = vshrl.u32 %v1216, 7
    %v1218 = vsub.s32 7, %v1217
    %v1219 = vrot.slane %v45, %v1218
    %v1220 = vlaneseq
    %v1221 = vshrl.u32 %v1220, 7
    %v1222 = vsub.s32 3, %v1221
    %v1223 = vrot.slane %v46, %v1222
    %v1224 = vlaneseq
    %v1225 = vshrl.u32 %v1224, 7
    %v1226 = vsub.s32 7, %v1225
    %v1227 = vrot.slane %v46, %v1226
    %v1228 = vlaneseq
    %v1229 = vshrl.u32 %v1228, 7
    %v1230 = vsub.s32 3, %v1229
    %v1231 = vrot.slane %v47, %v1230
    %v1232 = vlaneseq
    %v1233 = vshrl.u32 %v1232, 7
    %v1234 = vsub.s32 7, %v1233
    %v1235 = vrot.slane %v47, %v1234
    %v1236 = vlaneseq
    %v1237 = vshrl.u32 %v1236, 7
    %v1238 = vsub.s32 3, %v1237
    %v1239 = vrot.slane %v48, %v1238
    %v1240 = vlaneseq
    %v1241 = vshrl.u32 %v1240, 7
    %v1242 = vsub.s32 7, %v1241
    %v1243 = vrot.slane %v48, %v1242
    %v1252 = vlaneseq
    %v1253 = vshrl.u32 %v1252, 7
    %v1254 = vsub.s32 3, %v1253
    %v1255 = vrot.slane %v1215, %v1254
    %v1256 = vlaneseq
    %v1257 = vshrl.u32 %v1256, 7
    %v1258 = vsub.s32 3, %v1257
    %v1259 = vrot.slane %v1219, %v1258
    %v1260 = vlaneseq
    %v1261 = vshrl.u32 %v1260, 7
    %v1262 = vsub.s32 3, %v1261
    %v1263 = vrot.slane %v1223, %v1262
    %v1264 = vlaneseq
    %v1265 = vshrl.u32 %v1264, 7
    %v1266 = vsub.s32 3, %v1265
    %v1267 = vrot.slane %v1227, %v1266
    %v1268 = vlaneseq
    %v1269 = vshrl.u32 %v1268, 7
    %v1270 = vsub.s32 3, %v1269
    %v1271 = vrot.slane %v1231, %v1270
    %v1272 = vlaneseq
    %v1273 = vshrl.u32 %v1272, 7
    %v1274 = vsub.s32 3, %v1273
    %v1275 = vrot.slane %v1235, %v1274
    %v1276 = vlaneseq
    %v1277 = vshrl.u32 %v1276, 7
    %v1278 = vsub.s32 3, %v1277
    %v1279 = vrot.slane %v1239, %v1278
    %v1280 = vlaneseq
    %v1281 = vshrl.u32 %v1280, 7
    %v1282 = vsub.s32 3, %v1281
    %v1283 = vrot.slane %v1243, %v1282
    %v1286 = vcombine.high %v1032, %v1032
    %v1287 = vcombine.high %v1033, %v1033
    %v1290 = vmul.f32 %v1255, %v1032
    %v1291 = vmul.f32 %v1259, %v1286
    %v1292 = vmul.f32 %v1263, %v1033
    %v1293 = vmul.f32 %v1267, %v1287
    %v1294 = vmul.f32 %v1271, %v1032
    %v1295 = vmul.f32 %v1275, %v1286
    %v1296 = vmul.f32 %v1279, %v1033
    %v1297 = vmul.f32 %v1283, %v1287
    %v1306 = vcombine.low %v1290, %v1291
    %v1307 = vcombine.low %v1292, %v1293
    %v1308 = vcombine.low %v1294, %v1295
    %v1309 = vcombine.low %v1296, %v1297
    %v1314 = vsub.f32 %v1122, %v1306
    %v1315 = vsub.f32 %v1123, %v1307
    %v1316 = vsub.f32 %v1124, %v1308
    %v1317 = vsub.f32 %v1125, %v1309
    %v1318 = vadd.f32 %v1002, %v1314
    %v1319 = vadd.f32 %v1003, %v1315
    %v1320 = vadd.f32 %v1004, %v1316
    %v1321 = vadd.f32 %v1005, %v1317
    %v1330 = vcombine.low %v1204, %v1205
    %v1331 = vcombine.low %v1206, %v1207
    %v1332 = vcombine.low %v1208, %v1209
    %v1333 = vcombine.low %v1210, %v1211
    %v1338 = vadd.f32 %v1122, %v1330
    %v1339 = vadd.f32 %v1123, %v1331
    %v1340 = vadd.f32 %v1124, %v1332
    %v1341 = vadd.f32 %v1125, %v1333
    %v1342 = vadd.f32 %v1026, %v1338
    %v1343 = vadd.f32 %v1027, %v1339
    %v1344 = vadd.f32 %v1028, %v1340
    %v1345 = vadd.f32 %v1029, %v1341
    %1346 = vst [vmem:[#allocation7] sm:$0xff] %v1318
    %1347 = vst [vmem:[#allocation7 + $0x8] sm:$0xff] %v1319
    %1348 = vst [vmem:[#allocation7 + $0x10] sm:$0xff] %v1320
    %1349 = vst [vmem:[#allocation7 + $0x18] sm:$0xff] %v1321
    %s1350 = scalar_lea.vmem [#allocation7], 32
    %1351 = vst [vmem:[%s1350] sm:$0xff] %v1342
    %1352 = vst [vmem:[%s1350 + $0x8] sm:$0xff] %v1343
    %1353 = vst [vmem:[%s1350 + $0x10] sm:$0xff] %v1344
    %1354 = vst [vmem:[%s1350 + $0x18] sm:$0xff] %v1345
    // Predicated region
    $region18: #{tpu_custom_call.1} parent=1 // pred_check
      _
    $region19: #{tpu_custom_call.1} parent=1 // pred_check_branch
      %1356 = sbr.rel (0) target = $region21
    $region20: #{tpu_custom_call.1} parent=1 // pred_region
      %s1358 = ssub.s32 1024, 1024
      %1359 = vsyncadd [#allocation4], %s1358
      %s1360 = sshll.u32 [#allocation7], 4
      %s1361 = int_to_ptr.vmem [resolvable:$true] %s1360
      %1366 = dma.vmem_to_hbm [thread:$0]  %s1361, 1024, %s2, [#allocation4], 256, 256, 16
    $region21: #{tpu_custom_call.1} parent=1 // pred_fallthru
      _
    // Predicated region
    $region22: #{tpu_custom_call.1} parent=1 // pred_check
      _
    $region23: #{tpu_custom_call.1} parent=1 // pred_check_branch
      %1368 = sbr.rel (0) target = $region25
    $region24: #{tpu_custom_call.1} parent=1 // pred_region
      %1369 = dma.done [#allocation4], 1024
    $region25: #{tpu_custom_call.1} parent=1 // pred_fallthru
      _
    %1370 = vsyncpa [#allocation3], 1
    %1371 = vsyncpa [#allocation6], 1
    %1372 = vsyncpa [#allocation4], 1

</llo_original>
